<compile_context>
chip_gen: v5e
topology: v5e:2x2
jax: 0.10.0
libtpu: 0.0.40
codegen_flags: <defaults>
</compile_context>

<pallas_src>
import jax
import jax.numpy as jnp
from jax.experimental import pallas as pl
from jax.experimental.pallas import tpu as pltpu


def mlp_kernel(params_ref, x_ref, o_ref):
    # params_ref (SMEM, f32[13]):
    #   [0:6]  w1 (2,3) row-major -> w1[i, j] = params[i*3 + j]
    #   [6:9]  b1 (3,)
    #   [9:12] w2 (3,1)           -> w2[j, 0] = params[9 + j]
    #   [12]   b2 (1,)
    # x_ref: (2, TILE_ROWS, LANES) VMEM tile, batch folded on (sublane, lane).
    x0 = x_ref[0].astype(jnp.float32)   # (TILE_ROWS, LANES), dense 2-D slab
    x1 = x_ref[1].astype(jnp.float32)

    acc = None
    for j in range(3):  # unrolled at trace time: pure VPU broadcast-FMA chain
        h = x0 * params_ref[j] + x1 * params_ref[3 + j] + params_ref[6 + j]
        h = jnp.maximum(h, 0.0)
        t = h * params_ref[9 + j]
        acc = t if acc is None else acc + t

    # Dense (TILE_ROWS, LANES) store -> full-vreg unmasked vst.
    o_ref[...] = (acc + params_ref[12]).astype(o_ref.dtype)


def net_forward(x, w1, b1, w2, b2, *, tile_rows=512, lanes=2048,
                io_dtype=jnp.float32):
    """x: (B, 2) -> (B, 1) with y = relu(x @ w1 + b1) @ w2 + b2.

    Weights stored (in_features, out_features), matching PyTorch's Linear
    (which stores (out, in) and computes x @ W.T + b).
    """
    B = x.shape[0]
    io_dtype = jnp.dtype(io_dtype)

    # ---- tiling: fold the batch onto (sublanes=rows, lanes) -----------------
    lanes = min(lanes, max(128, pl.cdiv(B, 128) * 128))        # multiple of 128
    rows = pl.cdiv(B, lanes)
    tile_rows = min(tile_rows, pl.cdiv(rows, 8) * 8)           # multiple of 8
    # Keep a >= 2-step grid when there is enough work (v7x megacore).
    if rows > 8 and rows // tile_rows < 2:
        tile_rows = max(8, (rows // 2 // 8) * 8)
    rows = pl.cdiv(rows, tile_rows) * tile_rows
    b_pad = rows * lanes
    grid = (rows // tile_rows,)

    # ---- pack all parameters into one SMEM scalar vector --------------------
    params = jnp.concatenate(
        [w1.reshape(-1), b1.reshape(-1), w2.reshape(-1), b2.reshape(-1)]
    ).astype(jnp.float32)  # (13,)

    # ---- feature-major slab: single fused cast+transpose(+pad) pass ---------
    # TODO(synk): if the caller can supply feature-major x (2, B) directly,
    # this transpose pass disappears entirely.
    xT = x.astype(io_dtype).T                                  # (2, B)
    if b_pad != B:
        xT = jnp.pad(xT, ((0, 0), (0, b_pad - B)))
    x_t = xT.reshape(2, rows, lanes)

    # ---- VMEM budget: double-buffered in+out tiles, clamped for v7x ---------
    step_bytes = (2 + 1) * tile_rows * lanes * io_dtype.itemsize
    vmem_limit = int(min(64 << 20, max(32 << 20, 2 * step_bytes + (4 << 20))))

    out = pl.pallas_call(
        mlp_kernel,
        out_shape=jax.ShapeDtypeStruct((rows, lanes), io_dtype),
        grid=grid,
        in_specs=[
            pl.BlockSpec(memory_space=pltpu.MemorySpace.SMEM),          # params
            pl.BlockSpec((2, tile_rows, lanes), lambda i: (0, i, 0)),   # x tile
        ],
        out_specs=pl.BlockSpec((tile_rows, lanes), lambda i: (i, 0)),
        compiler_params=pltpu.CompilerParams(
            dimension_semantics=("parallel",),
            vmem_limit_bytes=vmem_limit,
        ),
    )(params, x_t)

    # Back to (B, 1): reshape (+ tail slice), no transpose.
    flat = out.reshape(-1)
    if b_pad != B:
        flat = flat[:B]
    return flat.reshape(B, 1)


def init_params():
    # Deterministic init mimicking PyTorch nn.Linear defaults:
    # U(-1/sqrt(fan_in), 1/sqrt(fan_in)), stored as (in_features, out_features).
    key = jax.random.PRNGKey(42)
    k1, k2, k3, k4 = jax.random.split(key, 4)
    bound1 = 1.0 / jnp.sqrt(2.0)  # fc1 fan_in = 2
    bound2 = 1.0 / jnp.sqrt(3.0)  # fc2 fan_in = 3
    w1 = jax.random.uniform(k1, (2, 3), jnp.float32, -bound1, bound1)
    b1 = jax.random.uniform(k2, (3,), jnp.float32, -bound1, bound1)
    w2 = jax.random.uniform(k3, (3, 1), jnp.float32, -bound2, bound2)
    b2 = jax.random.uniform(k4, (1,), jnp.float32, -bound2, bound2)
    return w1, b1, w2, b2


if __name__ == "__main__":
    w1, b1, w2, b2 = init_params()

    def ref_net(xx):
        return jnp.maximum(xx @ w1 + b1, 0.0) @ w2 + b2

    # Primary small case: batch=8, in_features=2.
    x = jax.random.normal(jax.random.PRNGKey(0), (8, 2), dtype=jnp.float32)
    out = jax.block_until_ready(net_forward(x, w1, b1, w2, b2))
    assert out.shape == (8, 1), f"bad shape {out.shape}"
    assert jnp.allclose(out, ref_net(x), atol=1e-5), "mismatch vs reference"

    # Ragged batch exercising padding + the tail slice (still small).
    x2 = jax.random.normal(jax.random.PRNGKey(1), (300, 2), dtype=jnp.float32)
    out2 = jax.block_until_ready(net_forward(x2, w1, b1, w2, b2))
    assert out2.shape == (300, 1), f"bad shape {out2.shape}"
    assert jnp.allclose(out2, ref_net(x2), atol=1e-5), "mismatch vs reference (ragged)"

    print("KERNEL_OK")
</pallas_src>

<mosaic_0001>
module attributes {stable_mosaic.version = 11 : i64} {
  func.func @mlp_kernel(%arg0: i32, %arg1: memref<13xf32, #tpu.memory_space<smem>>, %arg2: memref<2x8x128xf32, #tpu.memory_space<vmem>>, %arg3: memref<8x128xf32, #tpu.memory_space<vmem>>) attributes {dimension_semantics = [#tpu.dimension_semantics<parallel>], iteration_bounds = array<i64: 1>, scalar_prefetch = 0 : i64, scratch_operands = 0 : i64, tpu.core_type = #tpu.core_type<tc>, window_params = [{transform_indices = @transform_0, window_bounds = array<i64: 13>}, {transform_indices = @transform_1, window_bounds = array<i64: 2, 8, 128>}, {transform_indices = @transform_2, window_bounds = array<i64: 8, 128>}]} {
    %c0 = arith.constant 0 : index
    %c0_0 = arith.constant 0 : index
    %c0_1 = arith.constant 0 : index
    %0 = vector.load %arg2[%c0, %c0_0, %c0_1] : memref<2x8x128xf32, #tpu.memory_space<vmem>>, vector<1x8x128xf32>
    %1 = vector.shape_cast %0 : vector<1x8x128xf32> to vector<8x128xf32>
    %c1 = arith.constant 1 : index
    %c0_2 = arith.constant 0 : index
    %c0_3 = arith.constant 0 : index
    %2 = vector.load %arg2[%c1, %c0_2, %c0_3] : memref<2x8x128xf32, #tpu.memory_space<vmem>>, vector<1x8x128xf32>
    %3 = vector.shape_cast %2 : vector<1x8x128xf32> to vector<8x128xf32>
    %c0_4 = arith.constant 0 : index
    %4 = memref.load %arg1[%c0_4] : memref<13xf32, #tpu.memory_space<smem>>
    %5 = vector.broadcast %4 : f32 to vector<8x128xf32>
    %6 = arith.mulf %1, %5 : vector<8x128xf32>
    %c3 = arith.constant 3 : index
    %7 = memref.load %arg1[%c3] : memref<13xf32, #tpu.memory_space<smem>>
    %8 = vector.broadcast %7 : f32 to vector<8x128xf32>
    %9 = arith.mulf %3, %8 : vector<8x128xf32>
    %10 = arith.addf %6, %9 : vector<8x128xf32>
    %c6 = arith.constant 6 : index
    %11 = memref.load %arg1[%c6] : memref<13xf32, #tpu.memory_space<smem>>
    %12 = vector.broadcast %11 : f32 to vector<8x128xf32>
    %13 = arith.addf %10, %12 : vector<8x128xf32>
    %cst = arith.constant 0.000000e+00 : f32
    %14 = vector.broadcast %cst : f32 to vector<8x128xf32>
    %15 = arith.maximumf %13, %14 : vector<8x128xf32>
    %c9 = arith.constant 9 : index
    %16 = memref.load %arg1[%c9] : memref<13xf32, #tpu.memory_space<smem>>
    %17 = vector.broadcast %16 : f32 to vector<8x128xf32>
    %18 = arith.mulf %15, %17 : vector<8x128xf32>
    %c1_5 = arith.constant 1 : index
    %19 = memref.load %arg1[%c1_5] : memref<13xf32, #tpu.memory_space<smem>>
    %20 = vector.broadcast %19 : f32 to vector<8x128xf32>
    %21 = arith.mulf %1, %20 : vector<8x128xf32>
    %c4 = arith.constant 4 : index
    %22 = memref.load %arg1[%c4] : memref<13xf32, #tpu.memory_space<smem>>
    %23 = vector.broadcast %22 : f32 to vector<8x128xf32>
    %24 = arith.mulf %3, %23 : vector<8x128xf32>
    %25 = arith.addf %21, %24 : vector<8x128xf32>
    %c7 = arith.constant 7 : index
    %26 = memref.load %arg1[%c7] : memref<13xf32, #tpu.memory_space<smem>>
    %27 = vector.broadcast %26 : f32 to vector<8x128xf32>
    %28 = arith.addf %25, %27 : vector<8x128xf32>
    %cst_6 = arith.constant 0.000000e+00 : f32
    %29 = vector.broadcast %cst_6 : f32 to vector<8x128xf32>
    %30 = arith.maximumf %28, %29 : vector<8x128xf32>
    %c10 = arith.constant 10 : index
    %31 = memref.load %arg1[%c10] : memref<13xf32, #tpu.memory_space<smem>>
    %32 = vector.broadcast %31 : f32 to vector<8x128xf32>
    %33 = arith.mulf %30, %32 : vector<8x128xf32>
    %34 = arith.addf %18, %33 : vector<8x128xf32>
    %c2 = arith.constant 2 : index
    %35 = memref.load %arg1[%c2] : memref<13xf32, #tpu.memory_space<smem>>
    %36 = vector.broadcast %35 : f32 to vector<8x128xf32>
    %37 = arith.mulf %1, %36 : vector<8x128xf32>
    %c5 = arith.constant 5 : index
    %38 = memref.load %arg1[%c5] : memref<13xf32, #tpu.memory_space<smem>>
    %39 = vector.broadcast %38 : f32 to vector<8x128xf32>
    %40 = arith.mulf %3, %39 : vector<8x128xf32>
    %41 = arith.addf %37, %40 : vector<8x128xf32>
    %c8 = arith.constant 8 : index
    %42 = memref.load %arg1[%c8] : memref<13xf32, #tpu.memory_space<smem>>
    %43 = vector.broadcast %42 : f32 to vector<8x128xf32>
    %44 = arith.addf %41, %43 : vector<8x128xf32>
    %cst_7 = arith.constant 0.000000e+00 : f32
    %45 = vector.broadcast %cst_7 : f32 to vector<8x128xf32>
    %46 = arith.maximumf %44, %45 : vector<8x128xf32>
    %c11 = arith.constant 11 : index
    %47 = memref.load %arg1[%c11] : memref<13xf32, #tpu.memory_space<smem>>
    %48 = vector.broadcast %47 : f32 to vector<8x128xf32>
    %49 = arith.mulf %46, %48 : vector<8x128xf32>
    %50 = arith.addf %34, %49 : vector<8x128xf32>
    %c12 = arith.constant 12 : index
    %51 = memref.load %arg1[%c12] : memref<13xf32, #tpu.memory_space<smem>>
    %52 = vector.broadcast %51 : f32 to vector<8x128xf32>
    %53 = arith.addf %50, %52 : vector<8x128xf32>
    %c0_8 = arith.constant 0 : index
    %c0_9 = arith.constant 0 : index
    %54 = vector.load %arg3[%c0_8, %c0_9] : memref<8x128xf32, #tpu.memory_space<vmem>>, vector<8x128xf32>
    tpu.vector_store %arg3[%c0_8, %c0_9], %53 {strides = array<i32>} : memref<8x128xf32, #tpu.memory_space<vmem>>, vector<8x128xf32>,
    return
  }
  func.func @transform_0(%arg0: i32) -> i32 {
    %c0_i32 = arith.constant 0 : i32
    %c0_i32_0 = arith.constant 0 : i32
    return %c0_i32 : i32
  }
  func.func @transform_1(%arg0: i32) -> (i32, i32, i32) {
    %c0_i32 = arith.constant 0 : i32
    %c0_i32_0 = arith.constant 0 : i32
    %c0_i32_1 = arith.constant 0 : i32
    return %c0_i32, %arg0, %c0_i32_0 : i32, i32, i32
  }
  func.func @transform_2(%arg0: i32) -> (i32, i32) {
    %c0_i32 = arith.constant 0 : i32
    %c0_i32_0 = arith.constant 0 : i32
    return %arg0, %c0_i32 : i32, i32
  }
}

</mosaic_0001>

<llo_original>
// kernel: tpu_custom_call.1
$region0: #{tpu_custom_call.1}
  #allocation0 [shape = 'u32[]', space=smem, size = 0x4, offset = 0x4, fixed_abs, tag = 'smem constant byte address 0x4 - core index']
  #allocation1 [shape = 'u32[72,128]{1,0:T(1,128)}', space=vmem, size = 0x9000, scoped, tag = 'internal scratch']
  %s0 = inlined_call_operand.hbm [shape: f32[13], index: 0, kind: input, shape index: {}]
  %s1 = inlined_call_operand.hbm [shape: f32[2,8,128], index: 1, kind: input, shape index: {}]
  %s2 = inlined_call_operand.hbm [shape: f32[8,128], index: 2, kind: output, shape index: {}]
  %s3 = sld [smem:[#allocation0]]
  $region26: #{tpu_custom_call.1} parent=0
    _
  %s5 = ssub.s32 1, %s3
  %s6 = scalar_select 0, %s5, %s3
  $region1: #{tpu_custom_call.1} parent=0
    #allocation2 [shape = 'u8[512]{0}', space=smem, size = 0x200, scoped, tag = 'input window, operand 0, single buffered']
    #allocation3 [shape = 's32[1]{0}', space=sflag, size = 0x4, scoped, tag = 'scoped memory for tpu_custom_call.1']
    #allocation4 [shape = 's32[1]{0}', space=sflag, size = 0x4, scoped, tag = 'scoped memory for tpu_custom_call.1']
    #allocation5 [shape = 's32[1]{0}', space=sflag, size = 0x4, scoped, tag = 'scoped memory for tpu_custom_call.1']
    #allocation6 [shape = 'u8[8192]{0}', space=vmem, size = 0x2000, scoped, tag = 'input window, operand 1, single buffered']
    #allocation7 [shape = 'u8[4096]{0}', space=vmem, size = 0x1000, scoped, tag = 'output window, operand 0, single buffered']
    %7 = vsyncpa [#allocation5], 0
    %8 = vsyncpa [#allocation3], 0
    %9 = vsyncpa [#allocation4], 0
    // Predicated region
    $region2: #{tpu_custom_call.1} parent=1 // pred_check
      _
    $region3: #{tpu_custom_call.1} parent=1 // pred_check_branch
      %11 = sbr.rel (0) target = $region5
    $region4: #{tpu_custom_call.1} parent=1 // pred_region
      %13 = vsyncadd [#allocation5], 0
      %s15 = sshll.u32 %s0, 4
      %s16 = int_to_ptr.hbm [resolvable:$true] %s15
      %18 = dma.hbm_to_smem %s16, 16, [#allocation2], [#allocation5]
    $region5: #{tpu_custom_call.1} parent=1 // pred_fallthru
      _
    // Predicated region
    $region6: #{tpu_custom_call.1} parent=1 // pred_check
      _
    $region7: #{tpu_custom_call.1} parent=1 // pred_check_branch
      %20 = sbr.rel (0) target = $region9
    $region8: #{tpu_custom_call.1} parent=1 // pred_region
      %22 = vsyncadd [#allocation3], 0
      %s23 = sshll.u32 %s1, 4
      %s24 = int_to_ptr.hbm [resolvable:$true] %s23
      %s25 = sshll.u32 [#allocation6], 4
      %s26 = int_to_ptr.vmem [resolvable:$true] %s25
      %31 = dma.hbm_to_vmem [thread:$0]  %s24, 256, %s26, [#allocation3], 128, 128, 8
    $region9: #{tpu_custom_call.1} parent=1 // pred_fallthru
      _
    // Predicated region
    $region10: #{tpu_custom_call.1} parent=1 // pred_check
      _
    $region11: #{tpu_custom_call.1} parent=1 // pred_check_branch
      %33 = sbr.rel (0) target = $region13
    $region12: #{tpu_custom_call.1} parent=1 // pred_region
      %35 = dma.done [#allocation5], 16
    $region13: #{tpu_custom_call.1} parent=1 // pred_fallthru
      _
    // Predicated region
    $region14: #{tpu_custom_call.1} parent=1 // pred_check
      _
    $region15: #{tpu_custom_call.1} parent=1 // pred_check_branch
      %37 = sbr.rel (0) target = $region17
    $region16: #{tpu_custom_call.1} parent=1 // pred_region
      %39 = dma.done [#allocation3], 256
    $region17: #{tpu_custom_call.1} parent=1 // pred_fallthru
      _
    %40 = sfence
    %v41 = vld [vmem:[#allocation6] sm:$0xff]
    %s42 = scalar_lea.vmem [#allocation6], 8
    %v43 = vld [vmem:[%s42] sm:$0xff]
    %s44 = sld [smem:[#allocation2]]
    %v45 = vstv %s44
    %v46 = vmul.f32 %v41, %v45
    %s47 = sld [smem:[#allocation2 + $0x3]]
    %v48 = vstv %s47
    %v49 = vmul.f32 %v43, %v48
    %v50 = vadd.f32 %v46, %v49
    %s51 = sld [smem:[#allocation2 + $0x6]]
    %v52 = vstv %s51
    %v53 = vadd.f32 %v50, %v52
    %v54 = vmax.f32 %v53, 0.0
    %s55 = sld [smem:[#allocation2 + $0x9]]
    %v56 = vstv %s55
    %v57 = vmul.f32 %v54, %v56
    %s58 = sld [smem:[#allocation2 + $0x1]]
    %v59 = vstv %s58
    %v60 = vmul.f32 %v41, %v59
    %s61 = sld [smem:[#allocation2 + $0x4]]
    %v62 = vstv %s61
    %v63 = vmul.f32 %v43, %v62
    %v64 = vadd.f32 %v60, %v63
    %s65 = sld [smem:[#allocation2 + $0x7]]
    %v66 = vstv %s65
    %v67 = vadd.f32 %v64, %v66
    %v68 = vmax.f32 %v67, 0.0
    %s69 = sld [smem:[#allocation2 + $0xa]]
    %v70 = vstv %s69
    %v71 = vmul.f32 %v68, %v70
    %v72 = vadd.f32 %v57, %v71
    %s73 = sld [smem:[#allocation2 + $0x2]]
    %v74 = vstv %s73
    %v75 = vmul.f32 %v41, %v74
    %s76 = sld [smem:[#allocation2 + $0x5]]
    %v77 = vstv %s76
    %v78 = vmul.f32 %v43, %v77
    %v79 = vadd.f32 %v75, %v78
    %s80 = sld [smem:[#allocation2 + $0x8]]
    %v81 = vstv %s80
    %v82 = vadd.f32 %v79, %v81
    %v83 = vmax.f32 %v82, 0.0
    %s84 = sld [smem:[#allocation2 + $0xb]]
    %v85 = vstv %s84
    %v86 = vmul.f32 %v83, %v85
    %v87 = vadd.f32 %v72, %v86
    %s88 = sld [smem:[#allocation2 + $0xc]]
    %v89 = vstv %s88
    %v90 = vadd.f32 %v87, %v89
    %91 = vst [vmem:[#allocation7] sm:$0xff] %v90
    // Predicated region
    $region18: #{tpu_custom_call.1} parent=1 // pred_check
      _
    $region19: #{tpu_custom_call.1} parent=1 // pred_check_branch
      %93 = sbr.rel (0) target = $region21
    $region20: #{tpu_custom_call.1} parent=1 // pred_region
      %95 = vsyncadd [#allocation4], 0
      %s97 = sshll.u32 [#allocation7], 4
      %s98 = int_to_ptr.vmem [resolvable:$true] %s97
      %s99 = sshll.u32 %s2, 4
      %s100 = int_to_ptr.hbm [resolvable:$true] %s99
      %102 = dma.vmem_to_hbm [thread:$0]  %s98, 128, %s100, [#allocation4]
    $region21: #{tpu_custom_call.1} parent=1 // pred_fallthru
      _
    // Predicated region
    $region22: #{tpu_custom_call.1} parent=1 // pred_check
      _
    $region23: #{tpu_custom_call.1} parent=1 // pred_check_branch
      %104 = sbr.rel (0) target = $region25
    $region24: #{tpu_custom_call.1} parent=1 // pred_region
      %106 = dma.done [#allocation4], 128
    $region25: #{tpu_custom_call.1} parent=1 // pred_fallthru
      _
    %107 = vsyncpa [#allocation3], 1
    %108 = vsyncpa [#allocation4], 1
    %109 = vsyncpa [#allocation5], 1

</llo_original>
